<compile_context>
chip_gen: v7x
topology: tpu7x:2x2x1
jax: 0.10.0
libtpu: 0.0.40
codegen_flags: <defaults>
</compile_context>

<pallas_src>
import jax
import jax.numpy as jnp
from jax.experimental import pallas as pl
from jax.experimental.pallas import tpu as pltpu


def _gen_poisson_kernel(b_ref, x_ref, w_ref, o_ref):
    # b_ref: (1,) bias scalar in SMEM (scalar prefetch)
    # x_ref: (rows, L) lane-dense packed samples (L = 128 for D <= 128)
    # w_ref: (L, P) block-diagonal weights (column g holds w for sample-slot g)
    # One K=L matmul performs the "segmented dot over groups of D lanes";
    # exp goes to the EUP slot; stores are P-wide per sample row-group.
    z = jnp.dot(x_ref[...], w_ref[...], preferred_element_type=jnp.float32)
    o_ref[...] = jnp.exp(z + b_ref[0]).astype(o_ref.dtype)


def _round_up(a, m):
    return (a + m - 1) // m * m


def generalized_poisson1(x, weight, bias, *, target_tile_bytes=4 << 20,
                         x_buffering=3, vmem_limit_bytes=32 << 20):
    """exp(x @ weight.T + bias).

    x:      (B, D) float
    weight: (O, D)  (PyTorch nn.Linear layout), O must be 1
    bias:   (O,)
    returns (B, O)
    """
    B, D = x.shape
    O = weight.shape[0]
    # TODO(synk): generalize the block-diagonal weight to output_dim > 1
    # (the module fixes output_dim = 1).
    assert O == 1, "GeneralizedPoisson1 uses output_dim == 1"
    dtype = x.dtype
    w = weight.reshape(D).astype(dtype)

    # ---- packing: P samples per 128-lane row (lane-dense input) -------------
    if D <= 128:
        Dp = max(int(pl.next_power_of_2(D)), 1)   # power of two => divides 128
        P = 128 // Dp
    else:
        Dp = _round_up(D, 128)                    # rows already lane-dense
        P = 1
    L = P * Dp                                    # packed row width (128 if D <= 128)

    if Dp != D:  # awkward D only: zero-pad features (copies x; D = 2^k avoids it)
        x = jnp.pad(x, ((0, 0), (0, Dp - D)))
        w = jnp.pad(w, (0, Dp - D))
    Bp = _round_up(B, P)
    if Bp != B:  # tiny batch pad so the packing reshape is exact (rare)
        x = jnp.pad(x, ((0, Bp - B), (0, 0)))

    # Free (row-major) reshape: (Bp, Dp) -> (Bp // P, L).
    x2 = x.reshape(Bp // P, L)
    n_rows = x2.shape[0]

    # Block-diagonal weight (L, P): column g holds w in rows [g*Dp, (g+1)*Dp).
    wbd = jnp.kron(jnp.eye(P, dtype=dtype), w.reshape(Dp, 1))

    # ---- batch tiling: ~target_tile_bytes of x per step, rows multiple of 8 -
    itemsize = jnp.dtype(dtype).itemsize
    rows_per_block = max(8, (target_tile_bytes // (L * itemsize)) // 8 * 8)
    if n_rows <= rows_per_block:
        # Small problem: if cleanly splittable, use two steps so the "parallel"
        # batch axis can shard across v7x's two TensorCores.
        if n_rows >= 16 and n_rows % 16 == 0:
            rows_per_block = n_rows // 2
        else:
            rows_per_block = n_rows        # block == full dim (demo path)
    grid = (pl.cdiv(n_rows, rows_per_block),)

    bias_s = jnp.asarray(bias, dtype=jnp.float32).reshape(1)

    cost = pl.CostEstimate(flops=2 * B * D * O,
                           transcendentals=B * O,
                           bytes_accessed=itemsize * (B * D + D * O + B * O))

    def _build_and_call(use_buffered):
        x_imap = lambda i, b_sm: (i, 0)
        if use_buffered:
            # Deeper buffering on the only streamed operand: at ~0.5 flop/byte
            # there is no compute to hide DMA issue latency behind.
            x_spec = pl.BlockSpec((rows_per_block, L), x_imap,
                                  pipeline_mode=pl.Buffered(x_buffering))
        else:
            x_spec = pl.BlockSpec((rows_per_block, L), x_imap)
        return pl.pallas_call(
            _gen_poisson_kernel,
            out_shape=jax.ShapeDtypeStruct((n_rows, P), dtype),
            grid_spec=pltpu.PrefetchScalarGridSpec(
                num_scalar_prefetch=1,                               # bias -> SMEM
                grid=grid,
                in_specs=[
                    x_spec,                                          # streamed x tiles
                    pl.BlockSpec((L, P), lambda i, b_sm: (0, 0)),    # resident weights
                ],
                out_specs=pl.BlockSpec((rows_per_block, P),
                                       lambda i, b_sm: (i, 0)),
            ),
            compiler_params=pltpu.CompilerParams(
                dimension_semantics=("parallel",),
                vmem_limit_bytes=vmem_limit_bytes),
            cost_estimate=cost,
        )(bias_s, x2, wbd)

    if x_buffering and x_buffering > 2 and hasattr(pl, "Buffered"):
        try:
            out2 = _build_and_call(True)
        except Exception:   # JAX builds without BlockSpec.pipeline_mode support
            out2 = _build_and_call(False)
    else:
        out2 = _build_and_call(False)

    # Free reshape back to per-sample order; drop any batch padding.
    return out2.reshape(Bp, O)[:B]


if __name__ == "__main__":
    # Small deterministic setup consistent with the module (output_dim = 1).
    batch, input_dim, output_dim = 8, 32, 1

    key = jax.random.PRNGKey(0)
    kx, kw, kb = jax.random.split(key, 3)

    x = jax.random.normal(kx, (batch, input_dim), dtype=jnp.float32)
    bound = 1.0 / (input_dim ** 0.5)
    weight = jax.random.uniform(kw, (output_dim, input_dim),
                                minval=-bound, maxval=bound, dtype=jnp.float32)
    bias = jax.random.uniform(kb, (output_dim,),
                              minval=-bound, maxval=bound, dtype=jnp.float32)

    out = generalized_poisson1(x, weight, bias)
    out = jax.block_until_ready(out)

    # Reference in plain JAX (what XLA alone would fuse -- preferable at this
    # toy size; the Pallas kernel targets large batches).
    ref = jnp.exp(x @ weight.T + bias)
    assert out.shape == (batch, output_dim)
    assert jnp.allclose(out, ref, rtol=1e-5, atol=1e-5)

    print("KERNEL_OK")
</pallas_src>

<mosaic_0001>
module attributes {stable_mosaic.version = 11 : i64} {
  func.func @_gen_poisson_kernel(%arg0: i32, %arg1: memref<1xf32, #tpu.memory_space<smem>>, %arg2: memref<2x128xf32, #tpu.memory_space<vmem>>, %arg3: memref<128x4xf32, #tpu.memory_space<vmem>>, %arg4: memref<2x4xf32, #tpu.memory_space<vmem>>) attributes {dimension_semantics = [#tpu.dimension_semantics<parallel>], iteration_bounds = array<i64: 1>, scalar_prefetch = 1 : i64, scratch_operands = 0 : i64, tpu.core_type = #tpu.core_type<tc>, window_params = [{transform_indices = @transform_0, window_bounds = array<i64: 2, 128>}, {pipeline_mode = #tpu.pipeline_mode<synchronous>, transform_indices = @transform_1, window_bounds = array<i64: 128, 4>}, {transform_indices = @transform_2, window_bounds = array<i64: 2, 4>}]} {
    %c0 = arith.constant 0 : index
    %c0_0 = arith.constant 0 : index
    %0 = vector.load %arg2[%c0, %c0_0] : memref<2x128xf32, #tpu.memory_space<vmem>>, vector<2x128xf32>
    %c0_1 = arith.constant 0 : index
    %c0_2 = arith.constant 0 : index
    %1 = vector.load %arg3[%c0_1, %c0_2] : memref<128x4xf32, #tpu.memory_space<vmem>>, vector<128x4xf32>
    %cst = arith.constant dense<0.000000e+00> : vector<2x4xf32>
    %2 = tpu.matmul %0, %1, %cst {dimension_numbers = #tpu.dot_dimension_numbers<[1], [0], [0], [1], [0, 0, 1, 1], [], []>} : vector<2x128xf32>, vector<128x4xf32>, vector<2x4xf32> -> vector<2x4xf32>
    %c0_3 = arith.constant 0 : index
    %3 = memref.load %arg1[%c0_3] : memref<1xf32, #tpu.memory_space<smem>>
    %4 = vector.broadcast %3 : f32 to vector<2x4xf32>
    %5 = arith.addf %2, %4 : vector<2x4xf32>
    %6 = math.exp %5 : vector<2x4xf32>
    %c0_4 = arith.constant 0 : index
    %c0_5 = arith.constant 0 : index
    %7 = vector.load %arg4[%c0_4, %c0_5] : memref<2x4xf32, #tpu.memory_space<vmem>>, vector<2x4xf32>
    tpu.vector_store %arg4[%c0_4, %c0_5], %6 {strides = array<i32>} : memref<2x4xf32, #tpu.memory_space<vmem>>, vector<2x4xf32>,
    return
  }
  func.func @transform_0(%arg0: i32, %arg1: memref<1xf32, #tpu.memory_space<smem>>) -> (i32, i32) {
    %c0_i32 = arith.constant 0 : i32
    %c0_i32_0 = arith.constant 0 : i32
    return %arg0, %c0_i32 : i32, i32
  }
  func.func @transform_1(%arg0: i32, %arg1: memref<1xf32, #tpu.memory_space<smem>>) -> (i32, i32) {
    %c0_i32 = arith.constant 0 : i32
    %c0_i32_0 = arith.constant 0 : i32
    %c0_i32_1 = arith.constant 0 : i32
    return %c0_i32, %c0_i32_0 : i32, i32
  }
  func.func @transform_2(%arg0: i32, %arg1: memref<1xf32, #tpu.memory_space<smem>>) -> (i32, i32) {
    %c0_i32 = arith.constant 0 : i32
    %c0_i32_0 = arith.constant 0 : i32
    return %arg0, %c0_i32 : i32, i32
  }
}

</mosaic_0001>

<llo_original>
// kernel: tpu_custom_call.1
$region0: #{tpu_custom_call.1}
  #allocation0 [shape = 'u32[]', space=smem, size = 0x4, offset = 0x4, fixed_abs, tag = 'smem constant byte address 0x4 - core index']
  #allocation1 [shape = 'u32[144,128]{1,0:T(1,128)}', space=vmem, size = 0x12000, scoped, tag = 'internal scratch']
  #allocation2 [shape = 's32[1]{0}', space=sflag, size = 0x4, scoped, tag = 'scoped memory for tpu_custom_call.1']
  #allocation3 [shape = 'f32[1]{0:T(128)S(6)}', space=smem, size = 0x200, scoped, tag = 'prefetched SMEM operand 0']
  %s0 = inlined_call_operand.<no memory space> [shape: f32[1], index: 0, kind: input, shape index: {}]
  %s1 = inlined_call_operand.vmem [shape: f32[2,128], index: 1, kind: input, shape index: {}]
  %s2 = inlined_call_operand.vmem [shape: f32[128,4], index: 2, kind: input, shape index: {}]
  %s3 = inlined_call_operand.hbm [shape: f32[2,4], index: 3, kind: output, shape index: {}]
  %s4 = sld [smem:[#allocation0]]
  $region18: #{tpu_custom_call.1} parent=0
    _
  %s6 = ssub.s32 1, %s4
  %s7 = scalar_select 0, %s6, %s4
  %8 = sst [smem:[#allocation3]] %s0
  $region1: #{tpu_custom_call.1} parent=0
    #allocation4 [shape = 'u8[1024]{0}', space=vmem, size = 0x400, scoped, tag = 'output window, operand 0, single buffered']
    #allocation5 [shape = 's32[1]{0}', space=sflag, size = 0x4, scoped, tag = 'scoped memory for tpu_custom_call.1']
    %9 = vsyncpa [#allocation5], 0
    // Predicated region
    $region2: #{tpu_custom_call.1} parent=1 // pred_check
      _
    $region3: #{tpu_custom_call.1} parent=1 // pred_check_branch
      %11 = sbr.rel (0) target = $region5
    $region4: #{tpu_custom_call.1} parent=1 // pred_region
      _
    $region5: #{tpu_custom_call.1} parent=1 // pred_fallthru
      _
    // Predicated region
    $region6: #{tpu_custom_call.1} parent=1 // pred_check
      _
    $region7: #{tpu_custom_call.1} parent=1 // pred_check_branch
      %13 = sbr.rel (0) target = $region9
    $region8: #{tpu_custom_call.1} parent=1 // pred_region
      _
    $region9: #{tpu_custom_call.1} parent=1 // pred_fallthru
      _
    %v14 = vld [vmem:[%s1] sm:$0x3]
    %v15 = vld [vmem:[%s2] sm:$0xff]
    %v16 = vld [vmem:[%s2 + $0x8] sm:$0xff]
    %v17 = vld [vmem:[%s2 + $0x10] sm:$0xff]
    %v18 = vld [vmem:[%s2 + $0x18] sm:$0xff]
    %v19 = vld [vmem:[%s2 + $0x20] sm:$0xff]
    %v20 = vld [vmem:[%s2 + $0x28] sm:$0xff]
    %v21 = vld [vmem:[%s2 + $0x30] sm:$0xff]
    %v22 = vld [vmem:[%s2 + $0x38] sm:$0xff]
    %v23 = vld [vmem:[%s2 + $0x40] sm:$0xff]
    %v24 = vld [vmem:[%s2 + $0x48] sm:$0xff]
    %v25 = vld [vmem:[%s2 + $0x50] sm:$0xff]
    %v26 = vld [vmem:[%s2 + $0x58] sm:$0xff]
    %v27 = vld [vmem:[%s2 + $0x60] sm:$0xff]
    %v28 = vld [vmem:[%s2 + $0x68] sm:$0xff]
    %v29 = vld [vmem:[%s2 + $0x70] sm:$0xff]
    %v30 = vld [vmem:[%s2 + $0x78] sm:$0xff]
    %s31 = sld [smem:[#allocation3]]
    %v32 = vstv %s31
    %33 = vmatprep.subr.mxu0 0.0
    %34 = vmatpush1.msra.mxu0 %v15
    %35 = vmatprep.subr.mxu0 0.0
    %36 = vmatpush1.msra.mxu0 %v16
    %37 = vmatprep.subr.mxu0 0.0
    %38 = vmatpush1.msra.mxu0 %v17
    %39 = vmatprep.subr.mxu0 0.0
    %40 = vmatpush1.msra.mxu0 %v18
    %41 = vmatprep.subr.mxu0 0.0
    %42 = vmatpush1.msra.mxu0 %v19
    %43 = vmatprep.subr.mxu0 0.0
    %44 = vmatpush1.msra.mxu0 %v20
    %45 = vmatprep.subr.mxu0 0.0
    %46 = vmatpush1.msra.mxu0 %v21
    %47 = vmatprep.subr.mxu0 0.0
    %48 = vmatpush1.msra.mxu0 %v22
    %49 = vmatprep.subr.mxu0 0.0
    %50 = vmatpush1.msra.mxu0 %v23
    %51 = vmatprep.subr.mxu0 0.0
    %52 = vmatpush1.msra.mxu0 %v24
    %53 = vmatprep.subr.mxu0 0.0
    %54 = vmatpush1.msra.mxu0 %v25
    %55 = vmatprep.subr.mxu0 0.0
    %56 = vmatpush1.msra.mxu0 %v26
    %57 = vmatprep.subr.mxu0 0.0
    %58 = vmatpush1.msra.mxu0 %v27
    %59 = vmatprep.subr.mxu0 0.0
    %60 = vmatpush1.msra.mxu0 %v28
    %61 = vmatprep.subr.mxu0 0.0
    %62 = vmatpush1.msra.mxu0 %v29
    %63 = vmatprep.subr.mxu0 0.0
    %64 = vmatpush1.msra.mxu0 %v30
    %65 = vmatprep.subr.mxu0 0.0
    %66 = vmatpush1.msra.mxu0 0.0
    %67 = vmatprep.subr.mxu0 0.0
    %68 = vmatpush1.msra.mxu0 0.0
    %69 = vmatprep.subr.mxu0 0.0
    %70 = vmatpush1.msra.mxu0 0.0
    %71 = vmatprep.subr.mxu0 0.0
    %72 = vmatpush1.msra.mxu0 0.0
    %73 = vmatprep.subr.mxu0 0.0
    %74 = vmatpush1.msra.mxu0 0.0
    %75 = vmatprep.subr.mxu0 0.0
    %76 = vmatpush1.msra.mxu0 0.0
    %77 = vmatprep.subr.mxu0 0.0
    %78 = vmatpush1.msra.mxu0 0.0
    %79 = vmatprep.subr.mxu0 0.0
    %80 = vmatpush1.msra.mxu0 0.0
    %81 = vmatprep.subr.mxu0 0.0
    %82 = vmatpush1.msra.mxu0 0.0
    %83 = vmatprep.subr.mxu0 0.0
    %84 = vmatpush1.msra.mxu0 0.0
    %85 = vmatprep.subr.mxu0 0.0
    %86 = vmatpush1.msra.mxu0 0.0
    %87 = vmatprep.subr.mxu0 0.0
    %88 = vmatpush1.msra.mxu0 0.0
    %89 = vmatprep.subr.mxu0 0.0
    %90 = vmatpush1.msra.mxu0 0.0
    %91 = vmatprep.subr.mxu0 0.0
    %92 = vmatpush1.msra.mxu0 0.0
    %93 = vmatprep.subr.mxu0 0.0
    %94 = vmatpush1.msra.mxu0 0.0
    %95 = vmatprep.subr.mxu0 0.0
    %96 = vmatpush1.msra.mxu0 0.0
    %97 = vmatprep.mubr.f32.mxu0 0.0
    %98 = vmatmul.mubr.f32.gmra.mrb[0].mxu0 %v14
    %v99 = vpop.f32.mrb[0].mxu0
    %v100 = vadd.f32 %v32, %v99
    %v101 = vpop.f32.mrb[0].mxu0
    %102 = vdwg.mxu0
    %v103 = vmul.f32 %v100, 1.442695
    %v104 = vpow.pop %v103
    %vm105 = vcmask 25600
    %106 = vst.msk [vmem:[#allocation4] sm:$0x3] %vm105, %v104
    // Predicated region
    $region10: #{tpu_custom_call.1} parent=1 // pred_check
      _
    $region11: #{tpu_custom_call.1} parent=1 // pred_check_branch
      %108 = sbr.rel (0) target = $region13
    $region12: #{tpu_custom_call.1} parent=1 // pred_region
      %s110 = ssub.s32 32, 32
      %111 = vsyncadd [#allocation5], %s110
      %s113 = sshll.u32 [#allocation4], 4
      %s114 = int_to_ptr.vmem [resolvable:$true] %s113
      %116 = dma.vmem_to_hbm [thread:$0]  %s114, 32, %s3, [#allocation5]
    $region13: #{tpu_custom_call.1} parent=1 // pred_fallthru
      _
    // Predicated region
    $region14: #{tpu_custom_call.1} parent=1 // pred_check
      _
    $region15: #{tpu_custom_call.1} parent=1 // pred_check_branch
      %118 = sbr.rel (0) target = $region17
    $region16: #{tpu_custom_call.1} parent=1 // pred_region
      %119 = dma.done [#allocation5], 32
    $region17: #{tpu_custom_call.1} parent=1 // pred_fallthru
      _
    %120 = vsyncpa [#allocation5], 1

</llo_original>
